<compile_context>
chip_gen: v5e
topology: v5e:2x2
jax: 0.10.0
libtpu: 0.0.40
codegen_flags: <defaults>
</compile_context>

<pallas_src>
import functools

import jax
import jax.numpy as jnp
from jax import lax
from jax.experimental import pallas as pl
from jax.experimental.pallas import tpu as pltpu


def _round_up(x, m):
    return (x + m - 1) // m * m


def _tensorcores_per_device():
    """Grid-parallel TensorCores per JAX device (2 on megacore/v7x, else 1)."""
    try:
        kind = jax.devices()[0].device_kind.lower()
    except Exception:  # pragma: no cover - CPU / exotic backends
        return 1
    if any(tag in kind for tag in ("v7", "tpu7", "v4", "v5p")):
        return 2
    return 1


def _fused_cnn_kernel(p_ref, w1_ref, b1_ref, w2_ref, b2_ref, out_ref,
                      *, ow1, kh2, kw2):
    """One row-block: conv1(im2col matmul)+ReLU -> conv2(deep-K matmul)+ReLU."""
    rows = p_ref.shape[1]                     # padded rows per block (mult. of 8)

    # ---- conv1: patches @ w1 + b1, ReLU (single bf16 MXU matmul, f32 acc) ----
    h1 = jnp.dot(p_ref[0], w1_ref[...], preferred_element_type=jnp.float32)
    h1 = jnp.maximum(h1 + b1_ref[...], 0.0)   # (rows, C1p) f32

    # ---- conv2: build a deep-K im2col with sublane rotations, one matmul ----
    # Tap (i, j) contributes h1[q + d] (d = i*ow1 + j) to valid output row q.
    # Rolling h1 up by d produces exactly that for every valid row; wrap-around
    # only pollutes rows >= rows - d_max, all past the last valid output row
    # (q_max = m1 - d_max - 1 per batch element), so no masking is required.
    taps = []
    for i in range(kh2):
        for j in range(kw2):
            d = i * ow1 + j
            t = h1 if d == 0 else pltpu.roll(h1, shift=rows - d, axis=0)
            taps.append(t.astype(jnp.bfloat16))
    im2 = jnp.concatenate(taps, axis=-1)      # (rows, kh2*kw2*C1p), lane-aligned

    acc = jnp.dot(im2, w2_ref[...], preferred_element_type=jnp.float32)
    out_ref[0] = jnp.maximum(acc + b2_ref[...], 0.0).astype(out_ref.dtype)


def _im2col_nhwc(x_nhwc, kh, kw, stride):
    # x: (N, H, W, C) -> patches (N, OH*OW, KH*KW*C), (i, j) outer / channel inner.
    n, h, w, c = x_nhwc.shape
    oh = (h - kh) // stride + 1
    ow = (w - kw) // stride + 1
    cols = []
    for i in range(kh):
        for j in range(kw):
            cols.append(x_nhwc[:, i:i + stride * oh:stride,
                               j:j + stride * ow:stride, :])
    patches = jnp.concatenate(cols, axis=-1)            # (N, OH, OW, KH*KW*C)
    return patches.reshape(n, oh * ow, kh * kw * c), oh, ow


def cnn_forward_pallas(x_nchw, w1, b1, w2, b2):
    """Conv2d(k=5,s=2)+ReLU -> Conv2d(k=3,s=1)+ReLU, fused in one Pallas call."""
    n, c_in, h, w = x_nchw.shape
    co1, ci1, kh1, kw1 = w1.shape
    co2, ci2, kh2, kw2 = w2.shape
    assert ci1 == c_in and ci2 == co1
    stride1 = 2                                          # per the torch module

    # -- plain-JAX glue: NHWC + conv1 im2col (tiny at these problem sizes) --
    # TODO(synk): for large H*W, fold the conv1 im2col into the kernel (DMA the
    # NHWC block, 25 in-kernel taps) and tile the spatial dim with an explicit
    # vmem_limit_bytes so the block plan also fits v7x's 64 MiB VMEM.
    x_nhwc = jnp.transpose(x_nchw, (0, 2, 3, 1))
    patches, oh1, ow1 = _im2col_nhwc(x_nhwc, kh1, kw1, stride1)
    oh2, ow2 = oh1 - kh2 + 1, ow1 - kw2 + 1
    m1 = oh1 * ow1

    # -- zero-pad K / channel dims to multiples of 128 (lane-dense, full MXU) --
    k1 = kh1 * kw1 * ci1
    k1p = _round_up(k1, 128)          # conv1 contraction (100 -> 128)
    c1p = _round_up(co1, 128)         # conv1 out channels (64 -> 128)
    n2p = _round_up(co2, 128)         # conv2 out channels (128 -> 128)
    k2p = kh2 * kw2 * c1p             # conv2 deep-K (9 * 128 = 1152)

    # -- fold batch into M; keep >=2 parallel grid steps only on megacore chips --
    cores = _tensorcores_per_device()
    num_blocks = cores if (n % cores == 0) else 1
    bpb = n // num_blocks                                # batch elems per block
    rows = bpb * m1                                      # valid rows per block
    rows_p = _round_up(rows, 8)                          # sublane-aligned rows

    patches = jnp.pad(patches, ((0, 0), (0, 0), (0, k1p - k1)))
    patches = patches.reshape(num_blocks, rows, k1p)
    patches = jnp.pad(patches, ((0, 0), (0, rows_p - rows), (0, 0)))
    patches = patches.astype(jnp.bfloat16)

    w1_mat = jnp.transpose(w1, (2, 3, 1, 0)).reshape(k1, co1)
    w1_mat = jnp.pad(w1_mat, ((0, k1p - k1), (0, c1p - co1))).astype(jnp.bfloat16)
    b1_row = jnp.pad(b1, (0, c1p - co1)).reshape(1, c1p).astype(jnp.float32)

    w2_mat = jnp.transpose(w2, (2, 3, 1, 0))             # (kh2, kw2, ci2, co2)
    w2_mat = jnp.pad(w2_mat, ((0, 0), (0, 0), (0, c1p - ci2), (0, n2p - co2)))
    w2_mat = w2_mat.reshape(k2p, n2p).astype(jnp.bfloat16)  # tap-major K order
    b2_row = jnp.pad(b2, (0, n2p - co2)).reshape(1, n2p).astype(jnp.float32)

    kernel = functools.partial(_fused_cnn_kernel, ow1=ow1, kh2=kh2, kw2=kw2)

    flops = 2 * num_blocks * rows_p * (k1p * c1p + k2p * n2p)
    bytes_accessed = (patches.size * 2 + w1_mat.size * 2 + w2_mat.size * 2
                      + b1_row.size * 4 + b2_row.size * 4
                      + num_blocks * rows_p * n2p * 4)

    # TODO(synk): weight/bias specs could use pipeline_mode=pl.Buffered(1) to
    # skip double-buffering (~0.33 MB today); revisit once channel counts grow.
    out = pl.pallas_call(
        kernel,
        out_shape=jax.ShapeDtypeStruct((num_blocks, rows_p, n2p), jnp.float32),
        grid_spec=pltpu.PrefetchScalarGridSpec(
            num_scalar_prefetch=0,
            grid=(num_blocks,),
            in_specs=[
                pl.BlockSpec((1, rows_p, k1p), lambda b: (b, 0, 0)),   # patches
                pl.BlockSpec((k1p, c1p), lambda b: (0, 0)),            # w1
                pl.BlockSpec((1, c1p), lambda b: (0, 0)),              # b1
                pl.BlockSpec((k2p, n2p), lambda b: (0, 0)),            # w2 deep-K
                pl.BlockSpec((1, n2p), lambda b: (0, 0)),              # b2
            ],
            out_specs=pl.BlockSpec((1, rows_p, n2p), lambda b: (b, 0, 0)),
        ),
        compiler_params=pltpu.CompilerParams(
            dimension_semantics=("parallel",)),
        cost_estimate=pl.CostEstimate(
            flops=flops, transcendentals=0, bytes_accessed=bytes_accessed),
    )(patches, w1_mat, b1_row, w2_mat, b2_row)

    # Drop the per-block row padding, keep only valid conv2 rows / channels.
    out = out[:, :rows, :].reshape(n, oh1, ow1, n2p)[:, :oh2, :ow2, :co2]
    return jnp.transpose(out, (0, 3, 1, 2))               # NCHW


class CNNPallas:
    """Pallas re-implementation of the PyTorch CNN module forward pass.

    Matches: Conv2d(C_in, 64, k=5, s=2) -> ReLU -> Conv2d(64, 128, k=3, s=1) -> ReLU
    """

    def __init__(self, input_shape, key):
        self.input_shape = input_shape
        if len(input_shape) == 2:
            input_shape = (1, *input_shape)
        assert len(input_shape) == 3, "this script implements the 3-D (conv) branch"
        # TODO(synk): the len(input_shape)==1 Linear branch is not exercised here.
        c_in, h, w = input_shape
        k1, k2, k3, k4 = jax.random.split(key, 4)
        # Deterministic synthetic parameters (shapes match nn.Conv2d weights/biases).
        self.w1 = jax.random.normal(k1, (64, c_in, 5, 5), jnp.float32) * 0.05
        self.b1 = jax.random.normal(k2, (64,), jnp.float32) * 0.05
        self.w2 = jax.random.normal(k3, (128, 64, 3, 3), jnp.float32) * 0.05
        self.b2 = jax.random.normal(k4, (128,), jnp.float32) * 0.05
        oh1, ow1 = (h - 5) // 2 + 1, (w - 5) // 2 + 1
        oh2, ow2 = oh1 - 3 + 1, ow1 - 3 + 1
        self.num_feature = 128 * oh2 * ow2   # same probe result as the torch module

    def __call__(self, x):
        return cnn_forward_pallas(x, self.w1, self.b1, self.w2, self.b2)


def _conv_relu_ref(x, w, b, stride):
    y = lax.conv_general_dilated(
        x, w, window_strides=(stride, stride), padding="VALID",
        dimension_numbers=("NCHW", "OIHW", "NCHW"))
    return jnp.maximum(y + b[None, :, None, None], 0.0)


if __name__ == "__main__":
    key = jax.random.PRNGKey(0)
    k_params, k_x = jax.random.split(key)

    input_shape = (4, 16, 16)                 # (C, H, W) per the torch module
    model = CNNPallas(input_shape, k_params)

    x = jax.random.normal(k_x, (2, *input_shape), jnp.float32)   # NCHW, batch=2

    fwd = jax.jit(model.__call__)
    out = jax.block_until_ready(fwd(x))
    assert out.shape == (2, 128, 4, 4), out.shape

    # Reference check against XLA conv (f32); kernel computes in bf16/f32-acc.
    ref = _conv_relu_ref(x, model.w1, model.b1, stride=2)
    ref = _conv_relu_ref(ref, model.w2, model.b2, stride=1)
    ref = jax.block_until_ready(ref)
    err = float(jnp.max(jnp.abs(out - ref)))
    assert jnp.allclose(out, ref, atol=3e-2, rtol=3e-2), err

    print("KERNEL_OK")
</pallas_src>

<mosaic_0001>
module attributes {stable_mosaic.version = 11 : i64} {
  func.func @_fused_cnn_kernel(%arg0: i32, %arg1: memref<1x72x128xbf16, #tpu.memory_space<vmem>>, %arg2: memref<128x128xbf16, #tpu.memory_space<vmem>>, %arg3: memref<1x128xf32, #tpu.memory_space<vmem>>, %arg4: memref<1152x128xbf16, #tpu.memory_space<vmem>>, %arg5: memref<1x128xf32, #tpu.memory_space<vmem>>, %arg6: memref<1x72x128xf32, #tpu.memory_space<vmem>>) attributes {dimension_semantics = [#tpu.dimension_semantics<parallel>], iteration_bounds = array<i64: 1>, scalar_prefetch = 0 : i64, scratch_operands = 0 : i64, tpu.core_type = #tpu.core_type<tc>, window_params = [{transform_indices = @transform_0, window_bounds = array<i64: 1, 72, 128>}, {pipeline_mode = #tpu.pipeline_mode<synchronous>, transform_indices = @transform_1, window_bounds = array<i64: 128, 128>}, {pipeline_mode = #tpu.pipeline_mode<synchronous>, transform_indices = @transform_2, window_bounds = array<i64: 1, 128>}, {pipeline_mode = #tpu.pipeline_mode<synchronous>, transform_indices = @transform_3, window_bounds = array<i64: 1152, 128>}, {pipeline_mode = #tpu.pipeline_mode<synchronous>, transform_indices = @transform_4, window_bounds = array<i64: 1, 128>}, {transform_indices = @transform_5, window_bounds = array<i64: 1, 72, 128>}]} {
    %c0 = arith.constant 0 : index
    %c0_0 = arith.constant 0 : index
    %c0_1 = arith.constant 0 : index
    %0 = vector.load %arg1[%c0, %c0_0, %c0_1] : memref<1x72x128xbf16, #tpu.memory_space<vmem>>, vector<1x72x128xbf16>
    %1 = vector.shape_cast %0 : vector<1x72x128xbf16> to vector<72x128xbf16>
    %c0_2 = arith.constant 0 : index
    %c0_3 = arith.constant 0 : index
    %2 = vector.load %arg2[%c0_2, %c0_3] : memref<128x128xbf16, #tpu.memory_space<vmem>>, vector<128x128xbf16>
    %cst = arith.constant dense<0.000000e+00> : vector<72x128xf32>
    %3 = tpu.matmul %1, %2, %cst {dimension_numbers = #tpu.dot_dimension_numbers<[1], [0], [0], [1], [0, 0, 1, 1], [], []>} : vector<72x128xbf16>, vector<128x128xbf16>, vector<72x128xf32> -> vector<72x128xf32>
    %c0_4 = arith.constant 0 : index
    %c0_5 = arith.constant 0 : index
    %4 = vector.load %arg3[%c0_4, %c0_5] : memref<1x128xf32, #tpu.memory_space<vmem>>, vector<1x128xf32>
    %5 = vector.broadcast %4 : vector<1x128xf32> to vector<72x128xf32>
    %6 = arith.addf %3, %5 : vector<72x128xf32>
    %cst_6 = arith.constant 0.000000e+00 : f32
    %7 = vector.broadcast %cst_6 : f32 to vector<72x128xf32>
    %8 = arith.maximumf %6, %7 : vector<72x128xf32>
    %9 = arith.truncf %8 : vector<72x128xf32> to vector<72x128xbf16>
    %c71_i32 = arith.constant 71 : i32
    %10 = tpu.dynamic_rotate %8 by %c71_i32 dim 0 : vector<72x128xf32>, i32 -> vector<72x128xf32>
    %11 = arith.truncf %10 : vector<72x128xf32> to vector<72x128xbf16>
    %c70_i32 = arith.constant 70 : i32
    %12 = tpu.dynamic_rotate %8 by %c70_i32 dim 0 : vector<72x128xf32>, i32 -> vector<72x128xf32>
    %13 = arith.truncf %12 : vector<72x128xf32> to vector<72x128xbf16>
    %c66_i32 = arith.constant 66 : i32
    %14 = tpu.dynamic_rotate %8 by %c66_i32 dim 0 : vector<72x128xf32>, i32 -> vector<72x128xf32>
    %15 = arith.truncf %14 : vector<72x128xf32> to vector<72x128xbf16>
    %c65_i32 = arith.constant 65 : i32
    %16 = tpu.dynamic_rotate %8 by %c65_i32 dim 0 : vector<72x128xf32>, i32 -> vector<72x128xf32>
    %17 = arith.truncf %16 : vector<72x128xf32> to vector<72x128xbf16>
    %c64_i32 = arith.constant 64 : i32
    %18 = tpu.dynamic_rotate %8 by %c64_i32 dim 0 : vector<72x128xf32>, i32 -> vector<72x128xf32>
    %19 = arith.truncf %18 : vector<72x128xf32> to vector<72x128xbf16>
    %c60_i32 = arith.constant 60 : i32
    %20 = tpu.dynamic_rotate %8 by %c60_i32 dim 0 : vector<72x128xf32>, i32 -> vector<72x128xf32>
    %21 = arith.truncf %20 : vector<72x128xf32> to vector<72x128xbf16>
    %c59_i32 = arith.constant 59 : i32
    %22 = tpu.dynamic_rotate %8 by %c59_i32 dim 0 : vector<72x128xf32>, i32 -> vector<72x128xf32>
    %23 = arith.truncf %22 : vector<72x128xf32> to vector<72x128xbf16>
    %c58_i32 = arith.constant 58 : i32
    %24 = tpu.dynamic_rotate %8 by %c58_i32 dim 0 : vector<72x128xf32>, i32 -> vector<72x128xf32>
    %25 = arith.truncf %24 : vector<72x128xf32> to vector<72x128xbf16>
    %26 = tpu.concatenate %9, %11, %13, %15, %17, %19, %21, %23, %25 in 1 : vector<72x128xbf16>, vector<72x128xbf16>, vector<72x128xbf16>, vector<72x128xbf16>, vector<72x128xbf16>, vector<72x128xbf16>, vector<72x128xbf16>, vector<72x128xbf16>, vector<72x128xbf16> -> vector<72x1152xbf16>
    %c0_7 = arith.constant 0 : index
    %c0_8 = arith.constant 0 : index
    %27 = vector.load %arg4[%c0_7, %c0_8] : memref<1152x128xbf16, #tpu.memory_space<vmem>>, vector<1152x128xbf16>
    %cst_9 = arith.constant dense<0.000000e+00> : vector<72x128xf32>
    %28 = tpu.matmul %26, %27, %cst_9 {dimension_numbers = #tpu.dot_dimension_numbers<[1], [0], [0], [1], [0, 0, 1, 1], [], []>} : vector<72x1152xbf16>, vector<1152x128xbf16>, vector<72x128xf32> -> vector<72x128xf32>
    %c0_10 = arith.constant 0 : index
    %c0_11 = arith.constant 0 : index
    %29 = vector.load %arg5[%c0_10, %c0_11] : memref<1x128xf32, #tpu.memory_space<vmem>>, vector<1x128xf32>
    %30 = vector.broadcast %29 : vector<1x128xf32> to vector<72x128xf32>
    %31 = arith.addf %28, %30 : vector<72x128xf32>
    %cst_12 = arith.constant 0.000000e+00 : f32
    %32 = vector.broadcast %cst_12 : f32 to vector<72x128xf32>
    %33 = arith.maximumf %31, %32 : vector<72x128xf32>
    %c0_13 = arith.constant 0 : index
    %c0_14 = arith.constant 0 : index
    %c0_15 = arith.constant 0 : index
    %34 = vector.load %arg6[%c0_13, %c0_14, %c0_15] : memref<1x72x128xf32, #tpu.memory_space<vmem>>, vector<1x72x128xf32>
    %35 = vector.shape_cast %34 : vector<1x72x128xf32> to vector<72x128xf32>
    %36 = vector.shape_cast %33 : vector<72x128xf32> to vector<1x72x128xf32>
    tpu.vector_store %arg6[%c0_13, %c0_14, %c0_15], %36 {strides = array<i32>} : memref<1x72x128xf32, #tpu.memory_space<vmem>>, vector<1x72x128xf32>,
    return
  }
  func.func @transform_0(%arg0: i32) -> (i32, i32, i32) {
    %c0_i32 = arith.constant 0 : i32
    %c0_i32_0 = arith.constant 0 : i32
    %c0_i32_1 = arith.constant 0 : i32
    return %arg0, %c0_i32, %c0_i32_0 : i32, i32, i32
  }
  func.func @transform_1(%arg0: i32) -> (i32, i32) {
    %c0_i32 = arith.constant 0 : i32
    %c0_i32_0 = arith.constant 0 : i32
    %c0_i32_1 = arith.constant 0 : i32
    return %c0_i32, %c0_i32_0 : i32, i32
  }
  func.func @transform_2(%arg0: i32) -> (i32, i32) {
    %c0_i32 = arith.constant 0 : i32
    %c0_i32_0 = arith.constant 0 : i32
    %c0_i32_1 = arith.constant 0 : i32
    return %c0_i32, %c0_i32_0 : i32, i32
  }
  func.func @transform_3(%arg0: i32) -> (i32, i32) {
    %c0_i32 = arith.constant 0 : i32
    %c0_i32_0 = arith.constant 0 : i32
    %c0_i32_1 = arith.constant 0 : i32
    return %c0_i32, %c0_i32_0 : i32, i32
  }
  func.func @transform_4(%arg0: i32) -> (i32, i32) {
    %c0_i32 = arith.constant 0 : i32
    %c0_i32_0 = arith.constant 0 : i32
    %c0_i32_1 = arith.constant 0 : i32
    return %c0_i32, %c0_i32_0 : i32, i32
  }
  func.func @transform_5(%arg0: i32) -> (i32, i32, i32) {
    %c0_i32 = arith.constant 0 : i32
    %c0_i32_0 = arith.constant 0 : i32
    %c0_i32_1 = arith.constant 0 : i32
    return %arg0, %c0_i32, %c0_i32_0 : i32, i32, i32
  }
}

</mosaic_0001>

<llo_original>
// kernel: a_call__.1
$region0: #{a_call__.1}
  #allocation0 [shape = 'u32[]', space=smem, size = 0x4, offset = 0x4, fixed_abs, tag = 'smem constant byte address 0x4 - core index']
  #allocation1 [shape = 'u32[72,128]{1,0:T(1,128)}', space=vmem, size = 0x9000, scoped, tag = 'internal scratch']
  %s0 = inlined_call_operand.vmem [shape: bf16[1,72,128], index: 0, kind: input, shape index: {}]
  %s1 = inlined_call_operand.vmem [shape: bf16[128,128], index: 1, kind: input, shape index: {}]
  %s2 = inlined_call_operand.vmem [shape: f32[1,128], index: 2, kind: input, shape index: {}]
  %s3 = inlined_call_operand.vmem [shape: bf16[1152,128], index: 3, kind: input, shape index: {}]
  %s4 = inlined_call_operand.vmem [shape: f32[1,128], index: 4, kind: input, shape index: {}]
  %s5 = inlined_call_operand.vmem [shape: f32[1,72,128], index: 5, kind: output, shape index: {}]
  %s6 = sld [smem:[#allocation0]]
  $region30: #{a_call__.1} parent=0
    _
  %s8 = ssub.s32 1, %s6
  %s9 = scalar_select 0, %s8, %s6
  // Predicated region
  $region2: #{a_call__.1} parent=0 // pred_check
    _
  $region3: #{a_call__.1} parent=0 // pred_check_branch
    %11 = sbr.rel (0) target = $region5
  $region4: #{a_call__.1} parent=0 // pred_region
    _
  $region5: #{a_call__.1} parent=0 // pred_fallthru
    _
  // Predicated region
  $region6: #{a_call__.1} parent=0 // pred_check
    _
  $region7: #{a_call__.1} parent=0 // pred_check_branch
    %13 = sbr.rel (0) target = $region9
  $region8: #{a_call__.1} parent=0 // pred_region
    _
  $region9: #{a_call__.1} parent=0 // pred_fallthru
    _
  // Predicated region
  $region10: #{a_call__.1} parent=0 // pred_check
    _
  $region11: #{a_call__.1} parent=0 // pred_check_branch
    %15 = sbr.rel (0) target = $region13
  $region12: #{a_call__.1} parent=0 // pred_region
    _
  $region13: #{a_call__.1} parent=0 // pred_fallthru
    _
  // Predicated region
  $region14: #{a_call__.1} parent=0 // pred_check
    _
  $region15: #{a_call__.1} parent=0 // pred_check_branch
    %17 = sbr.rel (0) target = $region17
  $region16: #{a_call__.1} parent=0 // pred_region
    _
  $region17: #{a_call__.1} parent=0 // pred_fallthru
    _
  // Predicated region
  $region18: #{a_call__.1} parent=0 // pred_check
    _
  $region19: #{a_call__.1} parent=0 // pred_check_branch
    %19 = sbr.rel (0) target = $region21
  $region20: #{a_call__.1} parent=0 // pred_region
    _
  $region21: #{a_call__.1} parent=0 // pred_fallthru
    _
  %v20 = vld [vmem:[%s0] sm:$0xf]
  %v21 = vld [vmem:[%s0 + $0x4] sm:$0xf]
  %v22 = vld [vmem:[%s0 + $0x8] sm:$0xf]
  %v23 = vld [vmem:[%s0 + $0xc] sm:$0xf]
  %v24 = vld [vmem:[%s0 + $0x10] sm:$0xf]
  %v25 = vld [vmem:[%s0 + $0x14] sm:$0xf]
  %v26 = vld [vmem:[%s0 + $0x18] sm:$0xf]
  %v27 = vld [vmem:[%s0 + $0x1c] sm:$0xf]
  %v28 = vld [vmem:[%s0 + $0x20] sm:$0xf]
  %v29 = vld [vmem:[%s1] sm:$0xf]
  %v30 = vld [vmem:[%s1 + $0x4] sm:$0xf]
  %v31 = vld [vmem:[%s1 + $0x8] sm:$0xf]
  %v32 = vld [vmem:[%s1 + $0xc] sm:$0xf]
  %v33 = vld [vmem:[%s1 + $0x10] sm:$0xf]
  %v34 = vld [vmem:[%s1 + $0x14] sm:$0xf]
  %v35 = vld [vmem:[%s1 + $0x18] sm:$0xf]
  %v36 = vld [vmem:[%s1 + $0x1c] sm:$0xf]
  %v37 = vld [vmem:[%s1 + $0x20] sm:$0xf]
  %v38 = vld [vmem:[%s1 + $0x24] sm:$0xf]
  %v39 = vld [vmem:[%s1 + $0x28] sm:$0xf]
  %v40 = vld [vmem:[%s1 + $0x2c] sm:$0xf]
  %v41 = vld [vmem:[%s1 + $0x30] sm:$0xf]
  %v42 = vld [vmem:[%s1 + $0x34] sm:$0xf]
  %v43 = vld [vmem:[%s1 + $0x38] sm:$0xf]
  %v44 = vld [vmem:[%s1 + $0x3c] sm:$0xf]
  %v45 = vld [vmem:[%s2] sm:$0x1]
  %v47 = vperm.slane %v45, 0
  %v58 = vunpack.c.l.b16 %v20
  %v59 = vunpack.c.l.b16 %v21
  %v60 = vunpack.c.l.b16 %v22
  %v61 = vunpack.c.l.b16 %v23
  %v62 = vunpack.c.l.b16 %v24
  %v63 = vunpack.c.l.b16 %v25
  %v64 = vunpack.c.l.b16 %v26
  %v65 = vunpack.c.l.b16 %v27
  %v66 = vunpack.c.l.b16 %v28
  %v67 = vpack.c.b16 %v59, %v58
  %v68 = vpack.c.b16 %v61, %v60
  %v69 = vpack.c.b16 %v63, %v62
  %v70 = vpack.c.b16 %v65, %v64
  %v71 = vpack.c.b16 %v66, %v66
  %v93 = vunpack.c.l.b16 %v29
  %v94 = vunpack.c.l.b16 %v30
  %v95 = vunpack.c.l.b16 %v31
  %v96 = vunpack.c.l.b16 %v32
  %v97 = vunpack.c.l.b16 %v33
  %v98 = vunpack.c.l.b16 %v34
  %v99 = vunpack.c.l.b16 %v35
  %v100 = vunpack.c.l.b16 %v36
  %v101 = vunpack.c.l.b16 %v37
  %v102 = vunpack.c.l.b16 %v38
  %v103 = vunpack.c.l.b16 %v39
  %v104 = vunpack.c.l.b16 %v40
  %v105 = vunpack.c.l.b16 %v41
  %v106 = vunpack.c.l.b16 %v42
  %v107 = vunpack.c.l.b16 %v43
  %v108 = vunpack.c.l.b16 %v44
  %v109 = vpack.c.b16 %v94, %v93
  %v110 = vpack.c.b16 %v96, %v95
  %v111 = vpack.c.b16 %v98, %v97
  %v112 = vpack.c.b16 %v100, %v99
  %v113 = vpack.c.b16 %v102, %v101
  %v114 = vpack.c.b16 %v104, %v103
  %v115 = vpack.c.b16 %v106, %v105
  %v116 = vpack.c.b16 %v108, %v107
  %125 = vmatpush.bf16.msra.mxu0 %v116
  %126 = vmatpush.bf16.msra.mxu0 %v115
  %127 = vmatpush.bf16.msra.mxu0 %v114
  %128 = vmatpush.bf16.msra.mxu0 %v113
  %129 = vmatpush.bf16.msra.mxu0 %v112
  %130 = vmatpush.bf16.msra.mxu0 %v111
  %131 = vmatpush.bf16.msra.mxu0 %v110
  %132 = vmatpush.bf16.msra.mxu0 %v109
  %133 = vmatmul.bf16.gmra.mxu0 %v67
  %v134 = vpop.f32.mrf.mxu0
  %v135 = vadd.f32 %v47, %v134
  %v136 = vpop.f32.mrf.mxu0
  %v137 = vadd.f32 %v47, %v136
  %138 = vmatmul.bf16.gmra.mxu0 %v68
  %v139 = vpop.f32.mrf.mxu0
  %v140 = vadd.f32 %v47, %v139
  %v141 = vpop.f32.mrf.mxu0
  %v142 = vadd.f32 %v47, %v141
  %143 = vmatmul.bf16.gmra.mxu0 %v69
  %v144 = vpop.f32.mrf.mxu0
  %v145 = vadd.f32 %v47, %v144
  %v146 = vpop.f32.mrf.mxu0
  %v147 = vadd.f32 %v47, %v146
  %148 = vmatmul.bf16.gmra.mxu0 %v70
  %v149 = vpop.f32.mrf.mxu0
  %v150 = vadd.f32 %v47, %v149
  %v151 = vpop.f32.mrf.mxu0
  %v152 = vadd.f32 %v47, %v151
  %153 = vmatmul.bf16.gmra.mxu0 %v71
  %v154 = vpop.f32.mrf.mxu0
  %v155 = vadd.f32 %v47, %v154
  %v156 = vpop.f32.mrf.mxu0
  %157 = vdwg.mxu0
  %v158 = vmax.f32 %v135, 0.0
  %v159 = vmax.f32 %v137, 0.0
  %v160 = vmax.f32 %v140, 0.0
  %v161 = vmax.f32 %v142, 0.0
  %v162 = vmax.f32 %v145, 0.0
  %v163 = vmax.f32 %v147, 0.0
  %v164 = vmax.f32 %v150, 0.0
  %v165 = vmax.f32 %v152, 0.0
  %v166 = vmax.f32 %v155, 0.0
  %v167 = vpack.c.bf16 %v158, %v158
  %v168 = vpack.c.bf16 %v159, %v159
  %v169 = vpack.c.bf16 %v160, %v160
  %v170 = vpack.c.bf16 %v161, %v161
  %v171 = vpack.c.bf16 %v162, %v162
  %v172 = vpack.c.bf16 %v163, %v163
  %v173 = vpack.c.bf16 %v164, %v164
  %v174 = vpack.c.bf16 %v165, %v165
  %v175 = vpack.c.bf16 %v166, %v166
  %v176 = vrot.slane %v158, 1
  %v177 = vrot.slane %v159, 1
  %v178 = vrot.slane %v160, 1
  %v179 = vrot.slane %v161, 1
  %v180 = vrot.slane %v162, 1
  %v181 = vrot.slane %v163, 1
  %v182 = vrot.slane %v164, 1
  %v183 = vrot.slane %v165, 1
  %v184 = vrot.slane %v166, 1
  %v185 = vlaneseq
  %v186 = vshrl.u32 %v185, 7
  %vm187 = vcmp.lt.s32.totalorder %v186, 7
  %v188 = vsel %vm187, %v183, %v184
  %v189 = vsel %vm187, %v182, %v183
  %v190 = vsel %vm187, %v181, %v182
  %v191 = vsel %vm187, %v180, %v181
  %v192 = vsel %vm187, %v179, %v180
  %v193 = vsel %vm187, %v178, %v179
  %v194 = vsel %vm187, %v177, %v178
  %v195 = vsel %vm187, %v176, %v177
  %v196 = vsel %vm187, %v184, %v176
  %v197 = vpack.c.bf16 %v195, %v195
  %v198 = vpack.c.bf16 %v194, %v194
  %v199 = vpack.c.bf16 %v193, %v193
  %v200 = vpack.c.bf16 %v192, %v192
  %v201 = vpack.c.bf16 %v191, %v191
  %v202 = vpack.c.bf16 %v190, %v190
  %v203 = vpack.c.bf16 %v189, %v189
  %v204 = vpack.c.bf16 %v188, %v188
  %v205 = vpack.c.bf16 %v196, %v196
  %v206 = vrot.slane %v158, 2
  %v207 = vrot.slane %v159, 2
  %v208 = vrot.slane %v160, 2
  %v209 = vrot.slane %v161, 2
  %v210 = vrot.slane %v162, 2
  %v211 = vrot.slane %v163, 2
  %v212 = vrot.slane %v164, 2
  %v213 = vrot.slane %v165, 2
  %v214 = vrot.slane %v166, 2
  %vm215 = vcmp.lt.s32.totalorder %v186, 6
  %v216 = vsel %vm215, %v213, %v214
  %v217 = vsel %vm215, %v212, %v213
  %v218 = vsel %vm215, %v211, %v212
  %v219 = vsel %vm215, %v210, %v211
  %v220 = vsel %vm215, %v209, %v210
  %v221 = vsel %vm215, %v208, %v209
  %v222 = vsel %vm215, %v207, %v208
  %v223 = vsel %vm215, %v206, %v207
  %v224 = vsel %vm215, %v214, %v206
  %v225 = vpack.c.bf16 %v223, %v223
  %v226 = vpack.c.bf16 %v222, %v222
  %v227 = vpack.c.bf16 %v221, %v221
  %v228 = vpack.c.bf16 %v220, %v220
  %v229 = vpack.c.bf16 %v219, %v219
  %v230 = vpack.c.bf16 %v218, %v218
  %v231 = vpack.c.bf16 %v217, %v217
  %v232 = vpack.c.bf16 %v216, %v216
  %v233 = vpack.c.bf16 %v224, %v224
  %v234 = vrot.slane %v158, 6
  %v235 = vrot.slane %v159, 6
  %v236 = vrot.slane %v160, 6
  %v237 = vrot.slane %v161, 6
  %v238 = vrot.slane %v162, 6
  %v239 = vrot.slane %v163, 6
  %v240 = vrot.slane %v164, 6
  %v241 = vrot.slane %v165, 6
  %v242 = vrot.slane %v166, 6
  %vm243 = vcmp.lt.s32.totalorder %v186, 2
  %v244 = vsel %vm243, %v241, %v242
  %v245 = vsel %vm243, %v240, %v241
  %v246 = vsel %vm243, %v239, %v240
  %v247 = vsel %vm243, %v238, %v239
  %v248 = vsel %vm243, %v237, %v238
  %v249 = vsel %vm243, %v236, %v237
  %v250 = vsel %vm243, %v235, %v236
  %v251 = vsel %vm243, %v234, %v235
  %v252 = vsel %vm243, %v242, %v234
  %v253 = vpack.c.bf16 %v251, %v251
  %v254 = vpack.c.bf16 %v250, %v250
  %v255 = vpack.c.bf16 %v249, %v249
  %v256 = vpack.c.bf16 %v248, %v248
  %v257 = vpack.c.bf16 %v247, %v247
  %v258 = vpack.c.bf16 %v246, %v246
  %v259 = vpack.c.bf16 %v245, %v245
  %v260 = vpack.c.bf16 %v244, %v244
  %v261 = vpack.c.bf16 %v252, %v252
  %v262 = vrot.slane %v158, 7
  %v263 = vrot.slane %v159, 7
  %v264 = vrot.slane %v160, 7
  %v265 = vrot.slane %v161, 7
  %v266 = vrot.slane %v162, 7
  %v267 = vrot.slane %v163, 7
  %v268 = vrot.slane %v164, 7
  %v269 = vrot.slane %v165, 7
  %v270 = vrot.slane %v166, 7
  %vm271 = vcmp.lt.s32.totalorder %v186, 1
  %v272 = vsel %vm271, %v269, %v270
  %v273 = vsel %vm271, %v268, %v269
  %v274 = vsel %vm271, %v267, %v268
  %v275 = vsel %vm271, %v266, %v267
  %v276 = vsel %vm271, %v265, %v266
  %v277 = vsel %vm271, %v264, %v265
  %v278 = vsel %vm271, %v263, %v264
  %v279 = vsel %vm271, %v262, %v263
  %v280 = vsel %vm271, %v270, %v262
  %v281 = vpack.c.bf16 %v279, %v279
  %v282 = vpack.c.bf16 %v278, %v278
  %v283 = vpack.c.bf16 %v277, %v277
  %v284 = vpack.c.bf16 %v276, %v276
  %v285 = vpack.c.bf16 %v275, %v275
  %v286 = vpack.c.bf16 %v274, %v274
  %v287 = vpack.c.bf16 %v273, %v273
  %v288 = vpack.c.bf16 %v272, %v272
  %v289 = vpack.c.bf16 %v280, %v280
  %v290 = vrot.slane %v158, 4
  %v291 = vrot.slane %v159, 4
  %v292 = vrot.slane %v160, 4
  %v293 = vrot.slane %v161, 4
  %v294 = vrot.slane %v162, 4
  %v295 = vrot.slane %v163, 4
  %v296 = vrot.slane %v164, 4
  %v297 = vrot.slane %v165, 4
  %v298 = vrot.slane %v166, 4
  %vm299 = vcmp.lt.s32.totalorder %v186, 4
  %v300 = vsel %vm299, %v297, %v298
  %v301 = vsel %vm299, %v296, %v297
  %v302 = vsel %vm299, %v295, %v296
  %v303 = vsel %vm299, %v294, %v295
  %v304 = vsel %vm299, %v293, %v294
  %v305 = vsel %vm299, %v292, %v293
  %v306 = vsel %vm299, %v291, %v292
  %v307 = vsel %vm299, %v290, %v291
  %v308 = vsel %vm299, %v298, %v290
  %v309 = vpack.c.bf16 %v306, %v306
  %v310 = vpack.c.bf16 %v305, %v305
  %v311 = vpack.c.bf16 %v304, %v304
  %v312 = vpack.c.bf16 %v303, %v303
  %v313 = vpack.c.bf16 %v302, %v302
  %v314 = vpack.c.bf16 %v301, %v301
  %v315 = vpack.c.bf16 %v300, %v300
  %v316 = vpack.c.bf16 %v308, %v308
  %v317 = vpack.c.bf16 %v307, %v307
  %v318 = vrot.slane %v158, 5
  %v319 = vrot.slane %v159, 5
  %v320 = vrot.slane %v160, 5
  %v321 = vrot.slane %v161, 5
  %v322 = vrot.slane %v162, 5
  %v323 = vrot.slane %v163, 5
  %v324 = vrot.slane %v164, 5
  %v325 = vrot.slane %v165, 5
  %v326 = vrot.slane %v166, 5
  %vm327 = vcmp.lt.s32.totalorder %v186, 3
  %v328 = vsel %vm327, %v325, %v326
  %v329 = vsel %vm327, %v324, %v325
  %v330 = vsel %vm327, %v323, %v324
  %v331 = vsel %vm327, %v322, %v323
  %v332 = vsel %vm327, %v321, %v322
  %v333 = vsel %vm327, %v320, %v321
  %v334 = vsel %vm327, %v319, %v320
  %v335 = vsel %vm327, %v318, %v319
  %v336 = vsel %vm327, %v326, %v318
  %v337 = vpack.c.bf16 %v334, %v334
  %v338 = vpack.c.bf16 %v333, %v333
  %v339 = vpack.c.bf16 %v332, %v332
  %v340 = vpack.c.bf16 %v331, %v331
  %v341 = vpack.c.bf16 %v330, %v330
  %v342 = vpack.c.bf16 %v329, %v329
  %v343 = vpack.c.bf16 %v328, %v328
  %v344 = vpack.c.bf16 %v336, %v336
  %v345 = vpack.c.bf16 %v335, %v335
  %v355 = vunpack.c.l.b16 %v167
  %v356 = vunpack.c.l.b16 %v168
  %v357 = vunpack.c.l.b16 %v169
  %v358 = vunpack.c.l.b16 %v170
  %v359 = vunpack.c.l.b16 %v171
  %v360 = vunpack.c.l.b16 %v172
  %v361 = vunpack.c.l.b16 %v173
  %v362 = vunpack.c.l.b16 %v174
  %v363 = vunpack.c.l.b16 %v175
  %v364 = vpack.c.b16 %v356, %v355
  %v365 = vpack.c.b16 %v358, %v357
  %v366 = vpack.c.b16 %v360, %v359
  %v367 = vpack.c.b16 %v362, %v361
  %v368 = vpack.c.b16 %v363, %v363
  %v383 = vunpack.c.l.b16 %v197
  %v384 = vunpack.c.l.b16 %v198
  %v385 = vunpack.c.l.b16 %v199
  %v386 = vunpack.c.l.b16 %v200
  %v387 = vunpack.c.l.b16 %v201
  %v388 = vunpack.c.l.b16 %v202
  %v389 = vunpack.c.l.b16 %v203
  %v390 = vunpack.c.l.b16 %v204
  %v391 = vunpack.c.l.b16 %v205
  %v392 = vpack.c.b16 %v384, %v383
  %v393 = vpack.c.b16 %v386, %v385
  %v394 = vpack.c.b16 %v388, %v387
  %v395 = vpack.c.b16 %v390, %v389
  %v396 = vpack.c.b16 %v391, %v391
  %v411 = vunpack.c.l.b16 %v225
  %v412 = vunpack.c.l.b16 %v226
  %v413 = vunpack.c.l.b16 %v227
  %v414 = vunpack.c.l.b16 %v228
  %v415 = vunpack.c.l.b16 %v229
  %v416 = vunpack.c.l.b16 %v230
  %v417 = vunpack.c.l.b16 %v231
  %v418 = vunpack.c.l.b16 %v232
  %v419 = vunpack.c.l.b16 %v233
  %v420 = vpack.c.b16 %v412, %v411
  %v421 = vpack.c.b16 %v414, %v413
  %v422 = vpack.c.b16 %v416, %v415
  %v423 = vpack.c.b16 %v418, %v417
  %v424 = vpack.c.b16 %v419, %v419
  %v439 = vunpack.c.l.b16 %v253
  %v440 = vunpack.c.l.b16 %v254
  %v441 = vunpack.c.l.b16 %v255
  %v442 = vunpack.c.l.b16 %v256
  %v443 = vunpack.c.l.b16 %v257
  %v444 = vunpack.c.l.b16 %v258
  %v445 = vunpack.c.l.b16 %v259
  %v446 = vunpack.c.l.b16 %v260
  %v447 = vunpack.c.l.b16 %v261
  %v448 = vpack.c.b16 %v440, %v439
  %v449 = vpack.c.b16 %v442, %v441
  %v450 = vpack.c.b16 %v444, %v443
  %v451 = vpack.c.b16 %v446, %v445
  %v452 = vpack.c.b16 %v447, %v447
  %v467 = vunpack.c.l.b16 %v281
  %v468 = vunpack.c.l.b16 %v282
  %v469 = vunpack.c.l.b16 %v283
  %v470 = vunpack.c.l.b16 %v284
  %v471 = vunpack.c.l.b16 %v285
  %v472 = vunpack.c.l.b16 %v286
  %v473 = vunpack.c.l.b16 %v287
  %v474 = vunpack.c.l.b16 %v288
  %v475 = vunpack.c.l.b16 %v289
  %v476 = vpack.c.b16 %v468, %v467
  %v477 = vpack.c.b16 %v470, %v469
  %v478 = vpack.c.b16 %v472, %v471
  %v479 = vpack.c.b16 %v474, %v473
  %v480 = vpack.c.b16 %v475, %v475
  %v486 = vpack.c.b16 %v357, %v356
  %v487 = vpack.c.b16 %v359, %v358
  %v488 = vpack.c.b16 %v361, %v360
  %v489 = vpack.c.b16 %v363, %v362
  %v490 = vpack.c.b16 %v355, %v355
  %v505 = vunpack.c.l.b16 %v309
  %v506 = vunpack.c.l.b16 %v310
  %v507 = vunpack.c.l.b16 %v311
  %v508 = vunpack.c.l.b16 %v312
  %v509 = vunpack.c.l.b16 %v313
  %v510 = vunpack.c.l.b16 %v314
  %v511 = vunpack.c.l.b16 %v315
  %v512 = vunpack.c.l.b16 %v316
  %v513 = vunpack.c.l.b16 %v317
  %v514 = vpack.c.b16 %v506, %v505
  %v515 = vpack.c.b16 %v508, %v507
  %v516 = vpack.c.b16 %v510, %v509
  %v517 = vpack.c.b16 %v512, %v511
  %v518 = vpack.c.b16 %v513, %v513
  %v533 = vunpack.c.l.b16 %v337
  %v534 = vunpack.c.l.b16 %v338
  %v535 = vunpack.c.l.b16 %v339
  %v536 = vunpack.c.l.b16 %v340
  %v537 = vunpack.c.l.b16 %v341
  %v538 = vunpack.c.l.b16 %v342
  %v539 = vunpack.c.l.b16 %v343
  %v540 = vunpack.c.l.b16 %v344
  %v541 = vunpack.c.l.b16 %v345
  %v542 = vpack.c.b16 %v534, %v533
  %v543 = vpack.c.b16 %v536, %v535
  %v544 = vpack.c.b16 %v538, %v537
  %v545 = vpack.c.b16 %v540, %v539
  %v546 = vpack.c.b16 %v541, %v541
  %v552 = vpack.c.b16 %v441, %v440
  %v553 = vpack.c.b16 %v443, %v442
  %v554 = vpack.c.b16 %v445, %v444
  %v555 = vpack.c.b16 %v447, %v446
  %v556 = vpack.c.b16 %v439, %v439
  %v562 = vld [vmem:[%s3] sm:$0xf]
  %v563 = vld [vmem:[%s3 + $0x4] sm:$0xf]
  %v564 = vld [vmem:[%s3 + $0x8] sm:$0xf]
  %v565 = vld [vmem:[%s3 + $0xc] sm:$0xf]
  %v566 = vld [vmem:[%s3 + $0x10] sm:$0xf]
  %v567 = vld [vmem:[%s3 + $0x14] sm:$0xf]
  %v568 = vld [vmem:[%s3 + $0x18] sm:$0xf]
  %v569 = vld [vmem:[%s3 + $0x1c] sm:$0xf]
  %v570 = vld [vmem:[%s3 + $0x20] sm:$0xf]
  %v571 = vld [vmem:[%s3 + $0x24] sm:$0xf]
  %v572 = vld [vmem:[%s3 + $0x28] sm:$0xf]
  %v573 = vld [vmem:[%s3 + $0x2c] sm:$0xf]
  %v574 = vld [vmem:[%s3 + $0x30] sm:$0xf]
  %v575 = vld [vmem:[%s3 + $0x34] sm:$0xf]
  %v576 = vld [vmem:[%s3 + $0x38] sm:$0xf]
  %v577 = vld [vmem:[%s3 + $0x3c] sm:$0xf]
  %v578 = vld [vmem:[%s3 + $0x40] sm:$0xf]
  %v579 = vld [vmem:[%s3 + $0x44] sm:$0xf]
  %v580 = vld [vmem:[%s3 + $0x48] sm:$0xf]
  %v581 = vld [vmem:[%s3 + $0x4c] sm:$0xf]
  %v582 = vld [vmem:[%s3 + $0x50] sm:$0xf]
  %v583 = vld [vmem:[%s3 + $0x54] sm:$0xf]
  %v584 = vld [vmem:[%s3 + $0x58] sm:$0xf]
  %v585 = vld [vmem:[%s3 + $0x5c] sm:$0xf]
  %v586 = vld [vmem:[%s3 + $0x60] sm:$0xf]
  %v587 = vld [vmem:[%s3 + $0x64] sm:$0xf]
  %v588 = vld [vmem:[%s3 + $0x68] sm:$0xf]
  %v589 = vld [vmem:[%s3 + $0x6c] sm:$0xf]
  %v590 = vld [vmem:[%s3 + $0x70] sm:$0xf]
  %v591 = vld [vmem:[%s3 + $0x74] sm:$0xf]
  %v592 = vld [vmem:[%s3 + $0x78] sm:$0xf]
  %v593 = vld [vmem:[%s3 + $0x7c] sm:$0xf]
  %v594 = vld [vmem:[%s3 + $0x80] sm:$0xf]
  %v595 = vld [vmem:[%s3 + $0x84] sm:$0xf]
  %v596 = vld [vmem:[%s3 + $0x88] sm:$0xf]
  %v597 = vld [vmem:[%s3 + $0x8c] sm:$0xf]
  %v598 = vld [vmem:[%s3 + $0x90] sm:$0xf]
  %v599 = vld [vmem:[%s3 + $0x94] sm:$0xf]
  %v600 = vld [vmem:[%s3 + $0x98] sm:$0xf]
  %v601 = vld [vmem:[%s3 + $0x9c] sm:$0xf]
  %v602 = vld [vmem:[%s3 + $0xa0] sm:$0xf]
  %v603 = vld [vmem:[%s3 + $0xa4] sm:$0xf]
  %v604 = vld [vmem:[%s3 + $0xa8] sm:$0xf]
  %v605 = vld [vmem:[%s3 + $0xac] sm:$0xf]
  %v606 = vld [vmem:[%s3 + $0xb0] sm:$0xf]
  %v607 = vld [vmem:[%s3 + $0xb4] sm:$0xf]
  %v608 = vld [vmem:[%s3 + $0xb8] sm:$0xf]
  %v609 = vld [vmem:[%s3 + $0xbc] sm:$0xf]
  %v610 = vld [vmem:[%s3 + $0xc0] sm:$0xf]
  %v611 = vld [vmem:[%s3 + $0xc4] sm:$0xf]
  %v612 = vld [vmem:[%s3 + $0xc8] sm:$0xf]
  %v613 = vld [vmem:[%s3 + $0xcc] sm:$0xf]
  %v614 = vld [vmem:[%s3 + $0xd0] sm:$0xf]
  %v615 = vld [vmem:[%s3 + $0xd4] sm:$0xf]
  %v616 = vld [vmem:[%s3 + $0xd8] sm:$0xf]
  %v617 = vld [vmem:[%s3 + $0xdc] sm:$0xf]
  %v618 = vld [vmem:[%s3 + $0xe0] sm:$0xf]
  %v619 = vld [vmem:[%s3 + $0xe4] sm:$0xf]
  %v620 = vld [vmem:[%s3 + $0xe8] sm:$0xf]
  %v621 = vld [vmem:[%s3 + $0xec] sm:$0xf]
  %v622 = vld [vmem:[%s3 + $0xf0] sm:$0xf]
  %v623 = vld [vmem:[%s3 + $0xf4] sm:$0xf]
  %v624 = vld [vmem:[%s3 + $0xf8] sm:$0xf]
  %v625 = vld [vmem:[%s3 + $0xfc] sm:$0xf]
  %v626 = vld [vmem:[%s3 + $0x100] sm:$0xf]
  %v627 = vld [vmem:[%s3 + $0x104] sm:$0xf]
  %v628 = vld [vmem:[%s3 + $0x108] sm:$0xf]
  %v629 = vld [vmem:[%s3 + $0x10c] sm:$0xf]
  %v630 = vld [vmem:[%s3 + $0x110] sm:$0xf]
  %v631 = vld [vmem:[%s3 + $0x114] sm:$0xf]
  %v632 = vld [vmem:[%s3 + $0x118] sm:$0xf]
  %v633 = vld [vmem:[%s3 + $0x11c] sm:$0xf]
  %v634 = vld [vmem:[%s3 + $0x120] sm:$0xf]
  %v635 = vld [vmem:[%s3 + $0x124] sm:$0xf]
  %v636 = vld [vmem:[%s3 + $0x128] sm:$0xf]
  %v637 = vld [vmem:[%s3 + $0x12c] sm:$0xf]
  %v638 = vld [vmem:[%s3 + $0x130] sm:$0xf]
  %v639 = vld [vmem:[%s3 + $0x134] sm:$0xf]
  %v640 = vld [vmem:[%s3 + $0x138] sm:$0xf]
  %v641 = vld [vmem:[%s3 + $0x13c] sm:$0xf]
  %v642 = vld [vmem:[%s3 + $0x140] sm:$0xf]
  %v643 = vld [vmem:[%s3 + $0x144] sm:$0xf]
  %v644 = vld [vmem:[%s3 + $0x148] sm:$0xf]
  %v645 = vld [vmem:[%s3 + $0x14c] sm:$0xf]
  %v646 = vld [vmem:[%s3 + $0x150] sm:$0xf]
  %v647 = vld [vmem:[%s3 + $0x154] sm:$0xf]
  %v648 = vld [vmem:[%s3 + $0x158] sm:$0xf]
  %v649 = vld [vmem:[%s3 + $0x15c] sm:$0xf]
  %v650 = vld [vmem:[%s3 + $0x160] sm:$0xf]
  %v651 = vld [vmem:[%s3 + $0x164] sm:$0xf]
  %v652 = vld [vmem:[%s3 + $0x168] sm:$0xf]
  %v653 = vld [vmem:[%s3 + $0x16c] sm:$0xf]
  %v654 = vld [vmem:[%s3 + $0x170] sm:$0xf]
  %v655 = vld [vmem:[%s3 + $0x174] sm:$0xf]
  %v656 = vld [vmem:[%s3 + $0x178] sm:$0xf]
  %v657 = vld [vmem:[%s3 + $0x17c] sm:$0xf]
  %v658 = vld [vmem:[%s3 + $0x180] sm:$0xf]
  %v659 = vld [vmem:[%s3 + $0x184] sm:$0xf]
  %v660 = vld [vmem:[%s3 + $0x188] sm:$0xf]
  %v661 = vld [vmem:[%s3 + $0x18c] sm:$0xf]
  %v662 = vld [vmem:[%s3 + $0x190] sm:$0xf]
  %v663 = vld [vmem:[%s3 + $0x194] sm:$0xf]
  %v664 = vld [vmem:[%s3 + $0x198] sm:$0xf]
  %v665 = vld [vmem:[%s3 + $0x19c] sm:$0xf]
  %v666 = vld [vmem:[%s3 + $0x1a0] sm:$0xf]
  %v667 = vld [vmem:[%s3 + $0x1a4] sm:$0xf]
  %v668 = vld [vmem:[%s3 + $0x1a8] sm:$0xf]
  %v669 = vld [vmem:[%s3 + $0x1ac] sm:$0xf]
  %v670 = vld [vmem:[%s3 + $0x1b0] sm:$0xf]
  %v671 = vld [vmem:[%s3 + $0x1b4] sm:$0xf]
  %v672 = vld [vmem:[%s3 + $0x1b8] sm:$0xf]
  %v673 = vld [vmem:[%s3 + $0x1bc] sm:$0xf]
  %v674 = vld [vmem:[%s3 + $0x1c0] sm:$0xf]
  %v675 = vld [vmem:[%s3 + $0x1c4] sm:$0xf]
  %v676 = vld [vmem:[%s3 + $0x1c8] sm:$0xf]
  %v677 = vld [vmem:[%s3 + $0x1cc] sm:$0xf]
  %v678 = vld [vmem:[%s3 + $0x1d0] sm:$0xf]
  %v679 = vld [vmem:[%s3 + $0x1d4] sm:$0xf]
  %v680 = vld [vmem:[%s3 + $0x1d8] sm:$0xf]
  %v681 = vld [vmem:[%s3 + $0x1dc] sm:$0xf]
  %v682 = vld [vmem:[%s3 + $0x1e0] sm:$0xf]
  %v683 = vld [vmem:[%s3 + $0x1e4] sm:$0xf]
  %v684 = vld [vmem:[%s3 + $0x1e8] sm:$0xf]
  %v685 = vld [vmem:[%s3 + $0x1ec] sm:$0xf]
  %v686 = vld [vmem:[%s3 + $0x1f0] sm:$0xf]
  %v687 = vld [vmem:[%s3 + $0x1f4] sm:$0xf]
  %v688 = vld [vmem:[%s3 + $0x1f8] sm:$0xf]
  %v689 = vld [vmem:[%s3 + $0x1fc] sm:$0xf]
  %v690 = vld [vmem:[%s3 + $0x200] sm:$0xf]
  %v691 = vld [vmem:[%s3 + $0x204] sm:$0xf]
  %v692 = vld [vmem:[%s3 + $0x208] sm:$0xf]
  %v693 = vld [vmem:[%s3 + $0x20c] sm:$0xf]
  %v694 = vld [vmem:[%s3 + $0x210] sm:$0xf]
  %v695 = vld [vmem:[%s3 + $0x214] sm:$0xf]
  %v696 = vld [vmem:[%s3 + $0x218] sm:$0xf]
  %v697 = vld [vmem:[%s3 + $0x21c] sm:$0xf]
  %v698 = vld [vmem:[%s3 + $0x220] sm:$0xf]
  %v699 = vld [vmem:[%s3 + $0x224] sm:$0xf]
  %v700 = vld [vmem:[%s3 + $0x228] sm:$0xf]
  %v701 = vld [vmem:[%s3 + $0x22c] sm:$0xf]
  %v702 = vld [vmem:[%s3 + $0x230] sm:$0xf]
  %v703 = vld [vmem:[%s3 + $0x234] sm:$0xf]
  %v704 = vld [vmem:[%s3 + $0x238] sm:$0xf]
  %v705 = vld [vmem:[%s3 + $0x23c] sm:$0xf]
  %v706 = vld [vmem:[%s4] sm:$0x1]
  %v708 = vperm.slane %v706, 0
  %v854 = vunpack.c.l.b16 %v562
  %v855 = vunpack.c.l.b16 %v563
  %v856 = vunpack.c.l.b16 %v564
  %v857 = vunpack.c.l.b16 %v565
  %v858 = vunpack.c.l.b16 %v566
  %v859 = vunpack.c.l.b16 %v567
  %v860 = vunpack.c.l.b16 %v568
  %v861 = vunpack.c.l.b16 %v569
  %v862 = vunpack.c.l.b16 %v570
  %v863 = vunpack.c.l.b16 %v571
  %v864 = vunpack.c.l.b16 %v572
  %v865 = vunpack.c.l.b16 %v573
  %v866 = vunpack.c.l.b16 %v574
  %v867 = vunpack.c.l.b16 %v575
  %v868 = vunpack.c.l.b16 %v576
  %v869 = vunpack.c.l.b16 %v577
  %v870 = vunpack.c.l.b16 %v578
  %v871 = vunpack.c.l.b16 %v579
  %v872 = vunpack.c.l.b16 %v580
  %v873 = vunpack.c.l.b16 %v581
  %v874 = vunpack.c.l.b16 %v582
  %v875 = vunpack.c.l.b16 %v583
  %v876 = vunpack.c.l.b16 %v584
  %v877 = vunpack.c.l.b16 %v585
  %v878 = vunpack.c.l.b16 %v586
  %v879 = vunpack.c.l.b16 %v587
  %v880 = vunpack.c.l.b16 %v588
  %v881 = vunpack.c.l.b16 %v589
  %v882 = vunpack.c.l.b16 %v590
  %v883 = vunpack.c.l.b16 %v591
  %v884 = vunpack.c.l.b16 %v592
  %v885 = vunpack.c.l.b16 %v593
  %v886 = vunpack.c.l.b16 %v594
  %v887 = vunpack.c.l.b16 %v595
  %v888 = vunpack.c.l.b16 %v596
  %v889 = vunpack.c.l.b16 %v597
  %v890 = vunpack.c.l.b16 %v598
  %v891 = vunpack.c.l.b16 %v599
  %v892 = vunpack.c.l.b16 %v600
  %v893 = vunpack.c.l.b16 %v601
  %v894 = vunpack.c.l.b16 %v602
  %v895 = vunpack.c.l.b16 %v603
  %v896 = vunpack.c.l.b16 %v604
  %v897 = vunpack.c.l.b16 %v605
  %v898 = vunpack.c.l.b16 %v606
  %v899 = vunpack.c.l.b16 %v607
  %v900 = vunpack.c.l.b16 %v608
  %v901 = vunpack.c.l.b16 %v609
  %v902 = vunpack.c.l.b16 %v610
  %v903 = vunpack.c.l.b16 %v611
  %v904 = vunpack.c.l.b16 %v612
  %v905 = vunpack.c.l.b16 %v613
  %v906 = vunpack.c.l.b16 %v614
  %v907 = vunpack.c.l.b16 %v615
  %v908 = vunpack.c.l.b16 %v616
  %v909 = vunpack.c.l.b16 %v617
  %v910 = vunpack.c.l.b16 %v618
  %v911 = vunpack.c.l.b16 %v619
  %v912 = vunpack.c.l.b16 %v620
  %v913 = vunpack.c.l.b16 %v621
  %v914 = vunpack.c.l.b16 %v622
  %v915 = vunpack.c.l.b16 %v623
  %v916 = vunpack.c.l.b16 %v624
  %v917 = vunpack.c.l.b16 %v625
  %v918 = vunpack.c.l.b16 %v626
  %v919 = vunpack.c.l.b16 %v627
  %v920 = vunpack.c.l.b16 %v628
  %v921 = vunpack.c.l.b16 %v629
  %v922 = vunpack.c.l.b16 %v630
  %v923 = vunpack.c.l.b16 %v631
  %v924 = vunpack.c.l.b16 %v632
  %v925 = vunpack.c.l.b16 %v633
  %v926 = vunpack.c.l.b16 %v634
  %v927 = vunpack.c.l.b16 %v635
  %v928 = vunpack.c.l.b16 %v636
  %v929 = vunpack.c.l.b16 %v637
  %v930 = vunpack.c.l.b16 %v638
  %v931 = vunpack.c.l.b16 %v639
  %v932 = vunpack.c.l.b16 %v640
  %v933 = vunpack.c.l.b16 %v641
  %v934 = vunpack.c.l.b16 %v642
  %v935 = vunpack.c.l.b16 %v643
  %v936 = vunpack.c.l.b16 %v644
  %v937 = vunpack.c.l.b16 %v645
  %v938 = vunpack.c.l.b16 %v646
  %v939 = vunpack.c.l.b16 %v647
  %v940 = vunpack.c.l.b16 %v648
  %v941 = vunpack.c.l.b16 %v649
  %v942 = vunpack.c.l.b16 %v650
  %v943 = vunpack.c.l.b16 %v651
  %v944 = vunpack.c.l.b16 %v652
  %v945 = vunpack.c.l.b16 %v653
  %v946 = vunpack.c.l.b16 %v654
  %v947 = vunpack.c.l.b16 %v655
  %v948 = vunpack.c.l.b16 %v656
  %v949 = vunpack.c.l.b16 %v657
  %v950 = vunpack.c.l.b16 %v658
  %v951 = vunpack.c.l.b16 %v659
  %v952 = vunpack.c.l.b16 %v660
  %v953 = vunpack.c.l.b16 %v661
  %v954 = vunpack.c.l.b16 %v662
  %v955 = vunpack.c.l.b16 %v663
  %v956 = vunpack.c.l.b16 %v664
  %v957 = vunpack.c.l.b16 %v665
  %v958 = vunpack.c.l.b16 %v666
  %v959 = vunpack.c.l.b16 %v667
  %v960 = vunpack.c.l.b16 %v668
  %v961 = vunpack.c.l.b16 %v669
  %v962 = vunpack.c.l.b16 %v670
  %v963 = vunpack.c.l.b16 %v671
  %v964 = vunpack.c.l.b16 %v672
  %v965 = vunpack.c.l.b16 %v673
  %v966 = vunpack.c.l.b16 %v674
  %v967 = vunpack.c.l.b16 %v675
  %v968 = vunpack.c.l.b16 %v676
  %v969 = vunpack.c.l.b16 %v677
  %v970 = vunpack.c.l.b16 %v678
  %v971 = vunpack.c.l.b16 %v679
  %v972 = vunpack.c.l.b16 %v680
  %v973 = vunpack.c.l.b16 %v681
  %v974 = vunpack.c.l.b16 %v682
  %v975 = vunpack.c.l.b16 %v683
  %v976 = vunpack.c.l.b16 %v684
  %v977 = vunpack.c.l.b16 %v685
  %v978 = vunpack.c.l.b16 %v686
  %v979 = vunpack.c.l.b16 %v687
  %v980 = vunpack.c.l.b16 %v688
  %v981 = vunpack.c.l.b16 %v689
  %v982 = vunpack.c.l.b16 %v690
  %v983 = vunpack.c.l.b16 %v691
  %v984 = vunpack.c.l.b16 %v692
  %v985 = vunpack.c.l.b16 %v693
  %v986 = vunpack.c.l.b16 %v694
  %v987 = vunpack.c.l.b16 %v695
  %v988 = vunpack.c.l.b16 %v696
  %v989 = vunpack.c.l.b16 %v697
  %v990 = vunpack.c.l.b16 %v698
  %v991 = vunpack.c.l.b16 %v699
  %v992 = vunpack.c.l.b16 %v700
  %v993 = vunpack.c.l.b16 %v701
  %v994 = vunpack.c.l.b16 %v702
  %v995 = vunpack.c.l.b16 %v703
  %v996 = vunpack.c.l.b16 %v704
  %v997 = vunpack.c.l.b16 %v705
  %v998 = vpack.c.b16 %v855, %v854
  %v999 = vpack.c.b16 %v857, %v856
  %v1000 = vpack.c.b16 %v859, %v858
  %v1001 = vpack.c.b16 %v861, %v860
  %v1002 = vpack.c.b16 %v863, %v862
  %v1003 = vpack.c.b16 %v865, %v864
  %v1004 = vpack.c.b16 %v867, %v866
  %v1005 = vpack.c.b16 %v869, %v868
  %v1006 = vpack.c.b16 %v871, %v870
  %v1007 = vpack.c.b16 %v873, %v872
  %v1008 = vpack.c.b16 %v875, %v874
  %v1009 = vpack.c.b16 %v877, %v876
  %v1010 = vpack.c.b16 %v879, %v878
  %v1011 = vpack.c.b16 %v881, %v880
  %v1012 = vpack.c.b16 %v883, %v882
  %v1013 = vpack.c.b16 %v885, %v884
  %v1014 = vpack.c.b16 %v887, %v886
  %v1015 = vpack.c.b16 %v889, %v888
  %v1016 = vpack.c.b16 %v891, %v890
  %v1017 = vpack.c.b16 %v893, %v892
  %v1018 = vpack.c.b16 %v895, %v894
  %v1019 = vpack.c.b16 %v897, %v896
  %v1020 = vpack.c.b16 %v899, %v898
  %v1021 = vpack.c.b16 %v901, %v900
  %v1022 = vpack.c.b16 %v903, %v902
  %v1023 = vpack.c.b16 %v905, %v904
  %v1024 = vpack.c.b16 %v907, %v906
  %v1025 = vpack.c.b16 %v909, %v908
  %v1026 = vpack.c.b16 %v911, %v910
  %v1027 = vpack.c.b16 %v913, %v912
  %v1028 = vpack.c.b16 %v915, %v914
  %v1029 = vpack.c.b16 %v917, %v916
  %v1030 = vpack.c.b16 %v919, %v918
  %v1031 = vpack.c.b16 %v921, %v920
  %v1032 = vpack.c.b16 %v923, %v922
  %v1033 = vpack.c.b16 %v925, %v924
  %v1034 = vpack.c.b16 %v927, %v926
  %v1035 = vpack.c.b16 %v929, %v928
  %v1036 = vpack.c.b16 %v931, %v930
  %v1037 = vpack.c.b16 %v933, %v932
  %v1038 = vpack.c.b16 %v935, %v934
  %v1039 = vpack.c.b16 %v937, %v936
  %v1040 = vpack.c.b16 %v939, %v938
  %v1041 = vpack.c.b16 %v941, %v940
  %v1042 = vpack.c.b16 %v943, %v942
  %v1043 = vpack.c.b16 %v945, %v944
  %v1044 = vpack.c.b16 %v947, %v946
  %v1045 = vpack.c.b16 %v949, %v948
  %v1046 = vpack.c.b16 %v951, %v950
  %v1047 = vpack.c.b16 %v953, %v952
  %v1048 = vpack.c.b16 %v955, %v954
  %v1049 = vpack.c.b16 %v957, %v956
  %v1050 = vpack.c.b16 %v959, %v958
  %v1051 = vpack.c.b16 %v961, %v960
  %v1052 = vpack.c.b16 %v963, %v962
  %v1053 = vpack.c.b16 %v965, %v964
  %v1054 = vpack.c.b16 %v967, %v966
  %v1055 = vpack.c.b16 %v969, %v968
  %v1056 = vpack.c.b16 %v971, %v970
  %v1057 = vpack.c.b16 %v973, %v972
  %v1058 = vpack.c.b16 %v975, %v974
  %v1059 = vpack.c.b16 %v977, %v976
  %v1060 = vpack.c.b16 %v979, %v978
  %v1061 = vpack.c.b16 %v981, %v980
  %v1062 = vpack.c.b16 %v983, %v982
  %v1063 = vpack.c.b16 %v985, %v984
  %v1064 = vpack.c.b16 %v987, %v986
  %v1065 = vpack.c.b16 %v989, %v988
  %v1066 = vpack.c.b16 %v991, %v990
  %v1067 = vpack.c.b16 %v993, %v992
  %v1068 = vpack.c.b16 %v995, %v994
  %v1069 = vpack.c.b16 %v997, %v996
  %1142 = vmatpush.bf16.msra.mxu0 %v1005
  %1143 = vmatpush.bf16.msra.mxu0 %v1004
  %1144 = vmatpush.bf16.msra.mxu0 %v1003
  %1145 = vmatpush.bf16.msra.mxu0 %v1002
  %1146 = vmatpush.bf16.msra.mxu0 %v1001
  %1147 = vmatpush.bf16.msra.mxu0 %v1000
  %1148 = vmatpush.bf16.msra.mxu0 %v999
  %1149 = vmatpush.bf16.msra.mxu0 %v998
  %1150 = vmatmul.bf16.gmra.mxu0 %v364
  %v1151 = vpop.f32.mrf.mxu0
  %v1152 = vadd.f32 %v708, %v1151
  %v1153 = vpop.f32.mrf.mxu0
  %v1154 = vadd.f32 %v708, %v1153
  %1155 = vmatmul.bf16.gmra.mxu0 %v365
  %v1156 = vpop.f32.mrf.mxu0
  %v1157 = vadd.f32 %v708, %v1156
  %v1158 = vpop.f32.mrf.mxu0
  %v1159 = vadd.f32 %v708, %v1158
  %1160 = vmatmul.bf16.gmra.mxu0 %v366
  %v1161 = vpop.f32.mrf.mxu0
  %v1162 = vadd.f32 %v708, %v1161
  %v1163 = vpop.f32.mrf.mxu0
  %v1164 = vadd.f32 %v708, %v1163
  %1165 = vmatmul.bf16.gmra.mxu0 %v367
  %v1166 = vpop.f32.mrf.mxu0
  %v1167 = vadd.f32 %v708, %v1166
  %v1168 = vpop.f32.mrf.mxu0
  %v1169 = vadd.f32 %v708, %v1168
  %1170 = vmatmul.bf16.gmra.mxu0 %v368
  %v1171 = vpop.f32.mrf.mxu0
  %v1172 = vadd.f32 %v708, %v1171
  %v1173 = vpop.f32.mrf.mxu0
  %1174 = vdwg.mxu0
  %1175 = vmatpush.bf16.msra.mxu0 %v1013
  %1176 = vmatpush.bf16.msra.mxu0 %v1012
  %1177 = vmatpush.bf16.msra.mxu0 %v1011
  %1178 = vmatpush.bf16.msra.mxu0 %v1010
  %1179 = vmatpush.bf16.msra.mxu0 %v1009
  %1180 = vmatpush.bf16.msra.mxu0 %v1008
  %1181 = vmatpush.bf16.msra.mxu0 %v1007
  %1182 = vmatpush.bf16.msra.mxu0 %v1006
  %1183 = vmatmul.bf16.gmra.mxu0 %v392
  %v1184 = vpop.f32.mrf.mxu0
  %v1185 = vadd.f32 %v1152, %v1184
  %v1186 = vpop.f32.mrf.mxu0
  %v1187 = vadd.f32 %v1154, %v1186
  %1188 = vmatmul.bf16.gmra.mxu0 %v393
  %v1189 = vpop.f32.mrf.mxu0
  %v1190 = vadd.f32 %v1157, %v1189
  %v1191 = vpop.f32.mrf.mxu0
  %v1192 = vadd.f32 %v1159, %v1191
  %1193 = vmatmul.bf16.gmra.mxu0 %v394
  %v1194 = vpop.f32.mrf.mxu0
  %v1195 = vadd.f32 %v1162, %v1194
  %v1196 = vpop.f32.mrf.mxu0
  %v1197 = vadd.f32 %v1164, %v1196
  %1198 = vmatmul.bf16.gmra.mxu0 %v395
  %v1199 = vpop.f32.mrf.mxu0
  %v1200 = vadd.f32 %v1167, %v1199
  %v1201 = vpop.f32.mrf.mxu0
  %v1202 = vadd.f32 %v1169, %v1201
  %1203 = vmatmul.bf16.gmra.mxu0 %v396
  %v1204 = vpop.f32.mrf.mxu0
  %v1205 = vadd.f32 %v1172, %v1204
  %v1206 = vpop.f32.mrf.mxu0
  %1207 = vdwg.mxu0
  %1208 = vmatpush.bf16.msra.mxu0 %v1021
  %1209 = vmatpush.bf16.msra.mxu0 %v1020
  %1210 = vmatpush.bf16.msra.mxu0 %v1019
  %1211 = vmatpush.bf16.msra.mxu0 %v1018
  %1212 = vmatpush.bf16.msra.mxu0 %v1017
  %1213 = vmatpush.bf16.msra.mxu0 %v1016
  %1214 = vmatpush.bf16.msra.mxu0 %v1015
  %1215 = vmatpush.bf16.msra.mxu0 %v1014
  %1216 = vmatmul.bf16.gmra.mxu0 %v420
  %v1217 = vpop.f32.mrf.mxu0
  %v1218 = vadd.f32 %v1185, %v1217
  %v1219 = vpop.f32.mrf.mxu0
  %v1220 = vadd.f32 %v1187, %v1219
  %1221 = vmatmul.bf16.gmra.mxu0 %v421
  %v1222 = vpop.f32.mrf.mxu0
  %v1223 = vadd.f32 %v1190, %v1222
  %v1224 = vpop.f32.mrf.mxu0
  %v1225 = vadd.f32 %v1192, %v1224
  %1226 = vmatmul.bf16.gmra.mxu0 %v422
  %v1227 = vpop.f32.mrf.mxu0
  %v1228 = vadd.f32 %v1195, %v1227
  %v1229 = vpop.f32.mrf.mxu0
  %v1230 = vadd.f32 %v1197, %v1229
  %1231 = vmatmul.bf16.gmra.mxu0 %v423
  %v1232 = vpop.f32.mrf.mxu0
  %v1233 = vadd.f32 %v1200, %v1232
  %v1234 = vpop.f32.mrf.mxu0
  %v1235 = vadd.f32 %v1202, %v1234
  %1236 = vmatmul.bf16.gmra.mxu0 %v424
  %v1237 = vpop.f32.mrf.mxu0
  %v1238 = vadd.f32 %v1205, %v1237
  %v1239 = vpop.f32.mrf.mxu0
  %1240 = vdwg.mxu0
  %1241 = vmatpush.bf16.msra.mxu0 %v1029
  %1242 = vmatpush.bf16.msra.mxu0 %v1028
  %1243 = vmatpush.bf16.msra.mxu0 %v1027
  %1244 = vmatpush.bf16.msra.mxu0 %v1026
  %1245 = vmatpush.bf16.msra.mxu0 %v1025
  %1246 = vmatpush.bf16.msra.mxu0 %v1024
  %1247 = vmatpush.bf16.msra.mxu0 %v1023
  %1248 = vmatpush.bf16.msra.mxu0 %v1022
  %1249 = vmatmul.bf16.gmra.mxu0 %v448
  %v1250 = vpop.f32.mrf.mxu0
  %v1251 = vadd.f32 %v1218, %v1250
  %v1252 = vpop.f32.mrf.mxu0
  %v1253 = vadd.f32 %v1220, %v1252
  %1254 = vmatmul.bf16.gmra.mxu0 %v449
  %v1255 = vpop.f32.mrf.mxu0
  %v1256 = vadd.f32 %v1223, %v1255
  %v1257 = vpop.f32.mrf.mxu0
  %v1258 = vadd.f32 %v1225, %v1257
  %1259 = vmatmul.bf16.gmra.mxu0 %v450
  %v1260 = vpop.f32.mrf.mxu0
  %v1261 = vadd.f32 %v1228, %v1260
  %v1262 = vpop.f32.mrf.mxu0
  %v1263 = vadd.f32 %v1230, %v1262
  %1264 = vmatmul.bf16.gmra.mxu0 %v451
  %v1265 = vpop.f32.mrf.mxu0
  %v1266 = vadd.f32 %v1233, %v1265
  %v1267 = vpop.f32.mrf.mxu0
  %v1268 = vadd.f32 %v1235, %v1267
  %1269 = vmatmul.bf16.gmra.mxu0 %v452
  %v1270 = vpop.f32.mrf.mxu0
  %v1271 = vadd.f32 %v1238, %v1270
  %v1272 = vpop.f32.mrf.mxu0
  %1273 = vdwg.mxu0
  %1274 = vmatpush.bf16.msra.mxu0 %v1037
  %1275 = vmatpush.bf16.msra.mxu0 %v1036
  %1276 = vmatpush.bf16.msra.mxu0 %v1035
  %1277 = vmatpush.bf16.msra.mxu0 %v1034
  %1278 = vmatpush.bf16.msra.mxu0 %v1033
  %1279 = vmatpush.bf16.msra.mxu0 %v1032
  %1280 = vmatpush.bf16.msra.mxu0 %v1031
  %1281 = vmatpush.bf16.msra.mxu0 %v1030
  %1282 = vmatmul.bf16.gmra.mxu0 %v476
  %v1283 = vpop.f32.mrf.mxu0
  %v1284 = vadd.f32 %v1251, %v1283
  %v1285 = vpop.f32.mrf.mxu0
  %v1286 = vadd.f32 %v1253, %v1285
  %1287 = vmatmul.bf16.gmra.mxu0 %v477
  %v1288 = vpop.f32.mrf.mxu0
  %v1289 = vadd.f32 %v1256, %v1288
  %v1290 = vpop.f32.mrf.mxu0
  %v1291 = vadd.f32 %v1258, %v1290
  %1292 = vmatmul.bf16.gmra.mxu0 %v478
  %v1293 = vpop.f32.mrf.mxu0
  %v1294 = vadd.f32 %v1261, %v1293
  %v1295 = vpop.f32.mrf.mxu0
  %v1296 = vadd.f32 %v1263, %v1295
  %1297 = vmatmul.bf16.gmra.mxu0 %v479
  %v1298 = vpop.f32.mrf.mxu0
  %v1299 = vadd.f32 %v1266, %v1298
  %v1300 = vpop.f32.mrf.mxu0
  %v1301 = vadd.f32 %v1268, %v1300
  %1302 = vmatmul.bf16.gmra.mxu0 %v480
  %v1303 = vpop.f32.mrf.mxu0
  %v1304 = vadd.f32 %v1271, %v1303
  %v1305 = vpop.f32.mrf.mxu0
  %1306 = vdwg.mxu0
  %1307 = vmatpush.bf16.msra.mxu0 %v1045
  %1308 = vmatpush.bf16.msra.mxu0 %v1044
  %1309 = vmatpush.bf16.msra.mxu0 %v1043
  %1310 = vmatpush.bf16.msra.mxu0 %v1042
  %1311 = vmatpush.bf16.msra.mxu0 %v1041
  %1312 = vmatpush.bf16.msra.mxu0 %v1040
  %1313 = vmatpush.bf16.msra.mxu0 %v1039
  %1314 = vmatpush.bf16.msra.mxu0 %v1038
  %1315 = vmatmul.bf16.gmra.mxu0 %v486
  %v1316 = vpop.f32.mrf.mxu0
  %v1317 = vadd.f32 %v1284, %v1316
  %v1318 = vpop.f32.mrf.mxu0
  %v1319 = vadd.f32 %v1286, %v1318
  %1320 = vmatmul.bf16.gmra.mxu0 %v487
  %v1321 = vpop.f32.mrf.mxu0
  %v1322 = vadd.f32 %v1289, %v1321
  %v1323 = vpop.f32.mrf.mxu0
  %v1324 = vadd.f32 %v1291, %v1323
  %1325 = vmatmul.bf16.gmra.mxu0 %v488
  %v1326 = vpop.f32.mrf.mxu0
  %v1327 = vadd.f32 %v1294, %v1326
  %v1328 = vpop.f32.mrf.mxu0
  %v1329 = vadd.f32 %v1296, %v1328
  %1330 = vmatmul.bf16.gmra.mxu0 %v489
  %v1331 = vpop.f32.mrf.mxu0
  %v1332 = vadd.f32 %v1299, %v1331
  %v1333 = vpop.f32.mrf.mxu0
  %v1334 = vadd.f32 %v1301, %v1333
  %1335 = vmatmul.bf16.gmra.mxu0 %v490
  %v1336 = vpop.f32.mrf.mxu0
  %v1337 = vadd.f32 %v1304, %v1336
  %v1338 = vpop.f32.mrf.mxu0
  %1339 = vdwg.mxu0
  %1340 = vmatpush.bf16.msra.mxu0 %v1053
  %1341 = vmatpush.bf16.msra.mxu0 %v1052
  %1342 = vmatpush.bf16.msra.mxu0 %v1051
  %1343 = vmatpush.bf16.msra.mxu0 %v1050
  %1344 = vmatpush.bf16.msra.mxu0 %v1049
  %1345 = vmatpush.bf16.msra.mxu0 %v1048
  %1346 = vmatpush.bf16.msra.mxu0 %v1047
  %1347 = vmatpush.bf16.msra.mxu0 %v1046
  %1348 = vmatmul.bf16.gmra.mxu0 %v514
  %v1349 = vpop.f32.mrf.mxu0
  %v1350 = vadd.f32 %v1317, %v1349
  %v1351 = vpop.f32.mrf.mxu0
  %v1352 = vadd.f32 %v1319, %v1351
  %1353 = vmatmul.bf16.gmra.mxu0 %v515
  %v1354 = vpop.f32.mrf.mxu0
  %v1355 = vadd.f32 %v1322, %v1354
  %v1356 = vpop.f32.mrf.mxu0
  %v1357 = vadd.f32 %v1324, %v1356
  %1358 = vmatmul.bf16.gmra.mxu0 %v516
  %v1359 = vpop.f32.mrf.mxu0
  %v1360 = vadd.f32 %v1327, %v1359
  %v1361 = vpop.f32.mrf.mxu0
  %v1362 = vadd.f32 %v1329, %v1361
  %1363 = vmatmul.bf16.gmra.mxu0 %v517
  %v1364 = vpop.f32.mrf.mxu0
  %v1365 = vadd.f32 %v1332, %v1364
  %v1366 = vpop.f32.mrf.mxu0
  %v1367 = vadd.f32 %v1334, %v1366
  %1368 = vmatmul.bf16.gmra.mxu0 %v518
  %v1369 = vpop.f32.mrf.mxu0
  %v1370 = vadd.f32 %v1337, %v1369
  %v1371 = vpop.f32.mrf.mxu0
  %1372 = vdwg.mxu0
  %1373 = vmatpush.bf16.msra.mxu0 %v1061
  %1374 = vmatpush.bf16.msra.mxu0 %v1060
  %1375 = vmatpush.bf16.msra.mxu0 %v1059
  %1376 = vmatpush.bf16.msra.mxu0 %v1058
  %1377 = vmatpush.bf16.msra.mxu0 %v1057
  %1378 = vmatpush.bf16.msra.mxu0 %v1056
  %1379 = vmatpush.bf16.msra.mxu0 %v1055
  %1380 = vmatpush.bf16.msra.mxu0 %v1054
  %1381 = vmatmul.bf16.gmra.mxu0 %v542
  %v1382 = vpop.f32.mrf.mxu0
  %v1383 = vadd.f32 %v1350, %v1382
  %v1384 = vpop.f32.mrf.mxu0
  %v1385 = vadd.f32 %v1352, %v1384
  %1386 = vmatmul.bf16.gmra.mxu0 %v543
  %v1387 = vpop.f32.mrf.mxu0
  %v1388 = vadd.f32 %v1355, %v1387
  %v1389 = vpop.f32.mrf.mxu0
  %v1390 = vadd.f32 %v1357, %v1389
  %1391 = vmatmul.bf16.gmra.mxu0 %v544
  %v1392 = vpop.f32.mrf.mxu0
  %v1393 = vadd.f32 %v1360, %v1392
  %v1394 = vpop.f32.mrf.mxu0
  %v1395 = vadd.f32 %v1362, %v1394
  %1396 = vmatmul.bf16.gmra.mxu0 %v545
  %v1397 = vpop.f32.mrf.mxu0
  %v1398 = vadd.f32 %v1365, %v1397
  %v1399 = vpop.f32.mrf.mxu0
  %v1400 = vadd.f32 %v1367, %v1399
  %1401 = vmatmul.bf16.gmra.mxu0 %v546
  %v1402 = vpop.f32.mrf.mxu0
  %v1403 = vadd.f32 %v1370, %v1402
  %v1404 = vpop.f32.mrf.mxu0
  %1405 = vdwg.mxu0
  %1406 = vmatpush.bf16.msra.mxu0 %v1069
  %1407 = vmatpush.bf16.msra.mxu0 %v1068
  %1408 = vmatpush.bf16.msra.mxu0 %v1067
  %1409 = vmatpush.bf16.msra.mxu0 %v1066
  %1410 = vmatpush.bf16.msra.mxu0 %v1065
  %1411 = vmatpush.bf16.msra.mxu0 %v1064
  %1412 = vmatpush.bf16.msra.mxu0 %v1063
  %1413 = vmatpush.bf16.msra.mxu0 %v1062
  %1414 = vmatmul.bf16.gmra.mxu0 %v552
  %v1415 = vpop.f32.mrf.mxu0
  %v1416 = vadd.f32 %v1383, %v1415
  %v1417 = vpop.f32.mrf.mxu0
  %v1418 = vadd.f32 %v1385, %v1417
  %1419 = vmatmul.bf16.gmra.mxu0 %v553
  %v1420 = vpop.f32.mrf.mxu0
  %v1421 = vadd.f32 %v1388, %v1420
  %v1422 = vpop.f32.mrf.mxu0
  %v1423 = vadd.f32 %v1390, %v1422
  %1424 = vmatmul.bf16.gmra.mxu0 %v554
  %v1425 = vpop.f32.mrf.mxu0
  %v1426 = vadd.f32 %v1393, %v1425
  %v1427 = vpop.f32.mrf.mxu0
  %v1428 = vadd.f32 %v1395, %v1427
  %1429 = vmatmul.bf16.gmra.mxu0 %v555
  %v1430 = vpop.f32.mrf.mxu0
  %v1431 = vadd.f32 %v1398, %v1430
  %v1432 = vpop.f32.mrf.mxu0
  %v1433 = vadd.f32 %v1400, %v1432
  %1434 = vmatmul.bf16.gmra.mxu0 %v556
  %v1435 = vpop.f32.mrf.mxu0
  %v1436 = vadd.f32 %v1403, %v1435
  %v1437 = vpop.f32.mrf.mxu0
  %1438 = vdwg.mxu0
  %v1439 = vmax.f32 %v1416, 0.0
  %v1440 = vmax.f32 %v1418, 0.0
  %v1441 = vmax.f32 %v1421, 0.0
  %v1442 = vmax.f32 %v1423, 0.0
  %v1443 = vmax.f32 %v1426, 0.0
  %v1444 = vmax.f32 %v1428, 0.0
  %v1445 = vmax.f32 %v1431, 0.0
  %v1446 = vmax.f32 %v1433, 0.0
  %v1447 = vmax.f32 %v1436, 0.0
  %1448 = vst [vmem:[%s5] sm:$0xff] %v1439
  %1449 = vst [vmem:[%s5 + $0x8] sm:$0xff] %v1440
  %1450 = vst [vmem:[%s5 + $0x10] sm:$0xff] %v1441
  %1451 = vst [vmem:[%s5 + $0x18] sm:$0xff] %v1442
  %1452 = vst [vmem:[%s5 + $0x20] sm:$0xff] %v1443
  %1453 = vst [vmem:[%s5 + $0x28] sm:$0xff] %v1444
  %1454 = vst [vmem:[%s5 + $0x30] sm:$0xff] %v1445
  %1455 = vst [vmem:[%s5 + $0x38] sm:$0xff] %v1446
  %1456 = vst [vmem:[%s5 + $0x40] sm:$0xff] %v1447
  // Predicated region
  $region22: #{a_call__.1} parent=0 // pred_check
    _
  $region23: #{a_call__.1} parent=0 // pred_check_branch
    %1458 = sbr.rel (0) target = $region25
  $region24: #{a_call__.1} parent=0 // pred_region
    _
  $region25: #{a_call__.1} parent=0 // pred_fallthru
    _
  // Predicated region
  $region26: #{a_call__.1} parent=0 // pred_check
    _
  $region27: #{a_call__.1} parent=0 // pred_check_branch
    %1460 = sbr.rel (0) target = $region29
  $region28: #{a_call__.1} parent=0 // pred_region
    _
  $region29: #{a_call__.1} parent=0 // pred_fallthru
    _

</llo_original>
